<compile_context>
chip_gen: v6e
topology: v6e:2x2x1
jax: 0.10.0
libtpu: 0.0.40
codegen_flags: <defaults>
</compile_context>

<pallas_src>
import jax
import jax.numpy as jnp
from jax.experimental import pallas as pl
from jax.experimental.pallas import tpu as pltpu

LANE = 128  # TPU lane width: pad feature dims to this for lane-dense stores.


def _mlp2_kernel(x_ref, w1_ref, b1_ref, w2_ref, b2_ref, o_ref):
    """Fused 2-layer MLP on one batch tile: relu(relu(x @ W1 + b1) @ W2 + b2).

    Weights are bf16 (full-rate MXU on v6e/v7x, half the HBM bytes); both matmuls
    accumulate in f32 and the bias adds / ReLUs run in f32 on the VPU.
    """
    x = x_ref[...].astype(w1_ref.dtype)
    h = jnp.dot(x, w1_ref[...], preferred_element_type=jnp.float32)
    h = jnp.maximum(h + b1_ref[...], 0.0)                       # ReLU (layer 1)
    y = jnp.dot(h.astype(w2_ref.dtype), w2_ref[...],
                preferred_element_type=jnp.float32)
    y = jnp.maximum(y + b2_ref[...], 0.0)                       # ReLU (final)
    o_ref[...] = y.astype(o_ref.dtype)


def pack_params(params, param_dtype=jnp.bfloat16):
    """Zero-pad feature dims to LANE and cast weights to bf16.

    params: [(w1 (d0, h1), b1 (h1,)), (w2 (h1, h2), b2 (h2,))] in f32,
            weights already in (in_dim, out_dim) layout (PyTorch W.T).
    Padded W1 columns / b1 lanes are zero, so padded hidden lanes are exactly
    ReLU(0) = 0; padded W2 rows/cols and b2 lanes are zero too, so nothing leaks.
    """
    packed = []
    for li, (w, b) in enumerate(params):
        d_in, d_out = w.shape
        in_pad = d_in if li == 0 else LANE        # first layer keeps raw obs_dim K
        wp = jnp.zeros((in_pad, LANE), param_dtype)
        wp = wp.at[:d_in, :d_out].set(w.astype(param_dtype))
        bp = jnp.zeros((1, LANE), jnp.float32)
        bp = bp.at[0, :d_out].set(b.astype(jnp.float32))
        packed.append((wp, bp))
    return packed


def mlp_obs_encoder(obs, packed_params, out_dim, *, block_b=128):
    """obs: (B, obs_dim) f32. Returns (B, out_dim) f32."""
    (w1, b1), (w2, b2) = packed_params
    B, obs_dim = obs.shape
    nb = pl.cdiv(B, block_b)

    out_padded = pl.pallas_call(
        _mlp2_kernel,
        out_shape=jax.ShapeDtypeStruct((B, LANE), jnp.float32),
        grid_spec=pl.GridSpec(
            grid=(nb,),
            in_specs=[
                # Batch-tiled input: one (TB, obs_dim) row tile per grid step.
                pl.BlockSpec((block_b, obs_dim), lambda i: (i, 0)),
                # Weights / biases: constant index_map -> VMEM-resident across grid.
                pl.BlockSpec((obs_dim, LANE), lambda i: (0, 0)),
                pl.BlockSpec((1, LANE), lambda i: (0, 0)),
                pl.BlockSpec((LANE, LANE), lambda i: (0, 0)),
                pl.BlockSpec((1, LANE), lambda i: (0, 0)),
            ],
            # Lane-dense (TB, 128) output slab.
            out_specs=pl.BlockSpec((block_b, LANE), lambda i: (i, 0)),
        ),
        compiler_params=pltpu.CompilerParams(
            dimension_semantics=("parallel",),   # megacore sharding on v7x
        ),
    )(obs, w1, b1, w2, b2)

    # Slice the zero-padded lanes back off (plain XLA slice in the wrapper).
    return out_padded[:, :out_dim]


def init_params(key, obs_dim, hidden_dims):
    """nn.Linear-style init (uniform +/- 1/sqrt(fan_in)), weights as (in, out)."""
    dims = [obs_dim] + list(hidden_dims)
    params = []
    for d_in, d_out in zip(dims[:-1], dims[1:]):
        key, kw, kb = jax.random.split(key, 3)
        bound = 1.0 / jnp.sqrt(float(d_in))
        w = jax.random.uniform(kw, (d_in, d_out), jnp.float32, -bound, bound)
        b = jax.random.uniform(kb, (d_out,), jnp.float32, -bound, bound)
        params.append((w, b))
    return params


def reference_mlp(obs, params):
    """Pure f32 JAX reference of make_mlp_default forward (Linear+ReLU per layer)."""
    x = obs
    for w, b in params:
        x = jnp.maximum(x @ w + b[None, :], 0.0)
    return x


if __name__ == "__main__":
    # obs_dim=16, EXT_HIDDEN_DIMS=[32, 32]; batch = all (limb, timestep) rows
    # gathered into one call so the grid/pipeline actually does work.
    B, OBS_DIM = 512, 16
    EXT_HIDDEN_DIMS = [32, 32]
    BLOCK_B = 128

    key = jax.random.PRNGKey(0)
    key, k_obs = jax.random.split(key)
    obs = jax.random.normal(k_obs, (B, OBS_DIM), jnp.float32)

    params_f32 = init_params(key, OBS_DIM, EXT_HIDDEN_DIMS)
    packed = pack_params(params_f32, param_dtype=jnp.bfloat16)

    out = mlp_obs_encoder(obs, packed, EXT_HIDDEN_DIMS[-1], block_b=BLOCK_B)
    out = jax.block_until_ready(out)

    ref = reference_mlp(obs, params_f32)
    assert out.shape == (B, EXT_HIDDEN_DIMS[-1]), out.shape
    # bf16 weights -> relaxed tolerance vs the f32 reference.
    max_err = float(jnp.max(jnp.abs(out - ref)))
    assert max_err < 5e-2, f"mismatch vs JAX reference, max_err={max_err}"

    print("KERNEL_OK")
</pallas_src>

<mosaic_0001>
module attributes {stable_mosaic.version = 11 : i64} {
  func.func @_mlp2_kernel(%arg0: i32, %arg1: memref<128x16xf32, #tpu.memory_space<vmem>>, %arg2: memref<16x128xbf16, #tpu.memory_space<vmem>>, %arg3: memref<1x128xf32, #tpu.memory_space<vmem>>, %arg4: memref<128x128xbf16, #tpu.memory_space<vmem>>, %arg5: memref<1x128xf32, #tpu.memory_space<vmem>>, %arg6: memref<128x128xf32, #tpu.memory_space<vmem>>) attributes {dimension_semantics = [#tpu.dimension_semantics<parallel>], iteration_bounds = array<i64: 4>, scalar_prefetch = 0 : i64, scratch_operands = 0 : i64, tpu.core_type = #tpu.core_type<tc>, window_params = [{transform_indices = @transform_0, window_bounds = array<i64: 128, 16>}, {pipeline_mode = #tpu.pipeline_mode<synchronous>, transform_indices = @transform_1, window_bounds = array<i64: 16, 128>}, {pipeline_mode = #tpu.pipeline_mode<synchronous>, transform_indices = @transform_2, window_bounds = array<i64: 1, 128>}, {pipeline_mode = #tpu.pipeline_mode<synchronous>, transform_indices = @transform_3, window_bounds = array<i64: 128, 128>}, {pipeline_mode = #tpu.pipeline_mode<synchronous>, transform_indices = @transform_4, window_bounds = array<i64: 1, 128>}, {transform_indices = @transform_5, window_bounds = array<i64: 128, 128>}]} {
    %c0 = arith.constant 0 : index
    %c0_0 = arith.constant 0 : index
    %0 = vector.load %arg1[%c0, %c0_0] : memref<128x16xf32, #tpu.memory_space<vmem>>, vector<128x16xf32>
    %1 = arith.truncf %0 : vector<128x16xf32> to vector<128x16xbf16>
    %c0_1 = arith.constant 0 : index
    %c0_2 = arith.constant 0 : index
    %2 = vector.load %arg2[%c0_1, %c0_2] : memref<16x128xbf16, #tpu.memory_space<vmem>>, vector<16x128xbf16>
    %cst = arith.constant dense<0.000000e+00> : vector<128x128xf32>
    %3 = tpu.matmul %1, %2, %cst {dimension_numbers = #tpu.dot_dimension_numbers<[1], [0], [0], [1], [0, 0, 1, 1], [], []>} : vector<128x16xbf16>, vector<16x128xbf16>, vector<128x128xf32> -> vector<128x128xf32>
    %c0_3 = arith.constant 0 : index
    %c0_4 = arith.constant 0 : index
    %4 = vector.load %arg3[%c0_3, %c0_4] : memref<1x128xf32, #tpu.memory_space<vmem>>, vector<1x128xf32>
    %5 = vector.broadcast %4 : vector<1x128xf32> to vector<128x128xf32>
    %6 = arith.addf %3, %5 : vector<128x128xf32>
    %cst_5 = arith.constant 0.000000e+00 : f32
    %7 = vector.broadcast %cst_5 : f32 to vector<128x128xf32>
    %8 = arith.maximumf %6, %7 : vector<128x128xf32>
    %9 = arith.truncf %8 : vector<128x128xf32> to vector<128x128xbf16>
    %c0_6 = arith.constant 0 : index
    %c0_7 = arith.constant 0 : index
    %10 = vector.load %arg4[%c0_6, %c0_7] : memref<128x128xbf16, #tpu.memory_space<vmem>>, vector<128x128xbf16>
    %cst_8 = arith.constant dense<0.000000e+00> : vector<128x128xf32>
    %11 = tpu.matmul %9, %10, %cst_8 {dimension_numbers = #tpu.dot_dimension_numbers<[1], [0], [0], [1], [0, 0, 1, 1], [], []>} : vector<128x128xbf16>, vector<128x128xbf16>, vector<128x128xf32> -> vector<128x128xf32>
    %c0_9 = arith.constant 0 : index
    %c0_10 = arith.constant 0 : index
    %12 = vector.load %arg5[%c0_9, %c0_10] : memref<1x128xf32, #tpu.memory_space<vmem>>, vector<1x128xf32>
    %13 = vector.broadcast %12 : vector<1x128xf32> to vector<128x128xf32>
    %14 = arith.addf %11, %13 : vector<128x128xf32>
    %cst_11 = arith.constant 0.000000e+00 : f32
    %15 = vector.broadcast %cst_11 : f32 to vector<128x128xf32>
    %16 = arith.maximumf %14, %15 : vector<128x128xf32>
    %c0_12 = arith.constant 0 : index
    %c0_13 = arith.constant 0 : index
    %17 = vector.load %arg6[%c0_12, %c0_13] : memref<128x128xf32, #tpu.memory_space<vmem>>, vector<128x128xf32>
    tpu.vector_store %arg6[%c0_12, %c0_13], %16 {strides = array<i32>} : memref<128x128xf32, #tpu.memory_space<vmem>>, vector<128x128xf32>,
    return
  }
  func.func @transform_0(%arg0: i32) -> (i32, i32) {
    %c0_i32 = arith.constant 0 : i32
    %c0_i32_0 = arith.constant 0 : i32
    return %arg0, %c0_i32 : i32, i32
  }
  func.func @transform_1(%arg0: i32) -> (i32, i32) {
    %c0_i32 = arith.constant 0 : i32
    %c0_i32_0 = arith.constant 0 : i32
    %c0_i32_1 = arith.constant 0 : i32
    return %c0_i32, %c0_i32_0 : i32, i32
  }
  func.func @transform_2(%arg0: i32) -> (i32, i32) {
    %c0_i32 = arith.constant 0 : i32
    %c0_i32_0 = arith.constant 0 : i32
    %c0_i32_1 = arith.constant 0 : i32
    return %c0_i32, %c0_i32_0 : i32, i32
  }
  func.func @transform_3(%arg0: i32) -> (i32, i32) {
    %c0_i32 = arith.constant 0 : i32
    %c0_i32_0 = arith.constant 0 : i32
    %c0_i32_1 = arith.constant 0 : i32
    return %c0_i32, %c0_i32_0 : i32, i32
  }
  func.func @transform_4(%arg0: i32) -> (i32, i32) {
    %c0_i32 = arith.constant 0 : i32
    %c0_i32_0 = arith.constant 0 : i32
    %c0_i32_1 = arith.constant 0 : i32
    return %c0_i32, %c0_i32_0 : i32, i32
  }
  func.func @transform_5(%arg0: i32) -> (i32, i32) {
    %c0_i32 = arith.constant 0 : i32
    %c0_i32_0 = arith.constant 0 : i32
    return %arg0, %c0_i32 : i32, i32
  }
}

</mosaic_0001>

<llo_original>
// kernel: tpu_custom_call.1
$region0: #{tpu_custom_call.1}
  #allocation0 [shape = 'u32[]', space=smem, size = 0x4, offset = 0x4, fixed_abs, tag = 'smem constant byte address 0x4 - core index']
  #allocation1 [shape = 'u32[144,128]{1,0:T(1,128)}', space=vmem, size = 0x12000, scoped, tag = 'internal scratch']
  %s0 = inlined_call_operand.vmem [shape: f32[512,16], index: 0, kind: input, shape index: {}]
  %s1 = inlined_call_operand.vmem [shape: bf16[16,128], index: 1, kind: input, shape index: {}]
  %s2 = inlined_call_operand.vmem [shape: f32[1,128], index: 2, kind: input, shape index: {}]
  %s3 = inlined_call_operand.vmem [shape: bf16[128,128], index: 3, kind: input, shape index: {}]
  %s4 = inlined_call_operand.vmem [shape: f32[1,128], index: 4, kind: input, shape index: {}]
  %s5 = inlined_call_operand.hbm [shape: f32[512,128], index: 5, kind: output, shape index: {}]
  %s6 = sld [smem:[#allocation0]]
  $region53: #{tpu_custom_call.1} parent=0
    _
  %s8 = ssub.s32 1, %s6
  %s9 = scalar_select 0, %s8, %s6
  $region1: #{tpu_custom_call.1} parent=0
    #allocation2 [shape = 'u8[131072]{0}', space=vmem, size = 0x20000, scoped, tag = 'output window, operand 0']
    #allocation3 [shape = 's32[2]{0}', space=sflag, size = 0x8, scoped, tag = 'scoped memory for tpu_custom_call.1']
    %10 = vsyncpa [#allocation3], 0
    %s11 = scalar_lea.sflag [#allocation3], 1
    %12 = vsyncpa %s11, 0
    loop: start=0, step=1, limit=6
    $region2: #{tpu_custom_call.1} parent=1 // loop_pre_header
      _
    $region3: #{tpu_custom_call.1} parent=1 // loop_header
      %s14 = sphi 0, %s18
      %p15 = scmp.ge.s32.totalorder %s14, 6
      %s24 = sphi 0, %s26
      %s27 = sphi 0, %s24
      %s28 = sphi 0, %s27
      %s44 = sphi 0, %s28
      %s48 = sphi 0, %s48
      %s50 = sphi 0, %s48
      %s51 = sphi 0, %s50
      %s65 = sphi 0, %s51
      %s69 = sphi 0, %s69
      %s71 = sphi 0, %s69
      %s72 = sphi 0, %s71
      %s86 = sphi 0, %s72
      %s90 = sphi 0, %s90
      %s92 = sphi 0, %s90
      %s93 = sphi 0, %s92
      %s107 = sphi 0, %s93
      %s111 = sphi 0, %s111
      %s113 = sphi 0, %s111
      %s114 = sphi 0, %s113
      %s128 = sphi 0, %s114
      %s134 = sphi 0, %s136
      %s137 = sphi 0, %s134
      %s138 = sphi 0, %s137
      %s154 = sphi 0, %s138
    $region4: #{tpu_custom_call.1} parent=1 // loop_header_branch
      %17 = sbr.rel (%p15) target = $region8
    $region5: #{tpu_custom_call.1} parent=1 // loop_body
      %s19 = ssub.s32 %s14, 1
      %s20 = ssub.s32 %s14, 2
      %s21 = sadd.s32 %s14, 1
      %s22 = ssub.s32 %s14, %s21
      %p23 = scmp.eq.s32.totalorder %s22, 0
      %s25 = sadd.s32 %s24, 1
      %s26 = scalar_select %p23, %s24, %s25
      %p29 = pneg %p23
      %p30 = scmp.eq.s32.totalorder %s14, 3
      %p31 = por %p29, %p30
      %p32 = scmp.ne.s32.totalorder %s24, %s27
      %p33 = scmp.eq.s32.totalorder %s14, 0
      %p34 = por %p32, %p33
      %p35 = scmp.ne.s32.totalorder %s24, %s27
      %p36 = scmp.eq.s32.totalorder %s19, 3
      %p37 = por %p35, %p36
      %p38 = scmp.ne.s32.totalorder %s27, %s28
      %p39 = scmp.eq.s32.totalorder %s19, 0
      %p40 = por %p38, %p39
      %p41 = scmp.ne.s32.totalorder %s27, %s28
      %p42 = scmp.eq.s32.totalorder %s20, 3
      %p43 = por %p41, %p42
      %p45 = scmp.ne.s32.totalorder %s28, %s44
      %p46 = scmp.eq.s32.totalorder %s20, 0
      %p47 = por %p45, %p46
      %s49 = sadd.s32 %s48, 1
      %p52 = scmp.eq.s32.totalorder %s14, 3
      %p53 = scmp.ne.s32.totalorder %s48, %s50
      %p54 = scmp.eq.s32.totalorder %s14, 0
      %p55 = por %p53, %p54
      %p56 = scmp.ne.s32.totalorder %s48, %s50
      %p57 = scmp.eq.s32.totalorder %s19, 3
      %p58 = por %p56, %p57
      %p59 = scmp.ne.s32.totalorder %s50, %s51
      %p60 = scmp.eq.s32.totalorder %s19, 0
      %p61 = por %p59, %p60
      %p62 = scmp.ne.s32.totalorder %s50, %s51
      %p63 = scmp.eq.s32.totalorder %s20, 3
      %p64 = por %p62, %p63
      %p66 = scmp.ne.s32.totalorder %s51, %s65
      %p67 = scmp.eq.s32.totalorder %s20, 0
      %p68 = por %p66, %p67
      %s70 = sadd.s32 %s69, 1
      %p73 = scmp.eq.s32.totalorder %s14, 3
      %p74 = scmp.ne.s32.totalorder %s69, %s71
      %p75 = scmp.eq.s32.totalorder %s14, 0
      %p76 = por %p74, %p75
      %p77 = scmp.ne.s32.totalorder %s69, %s71
      %p78 = scmp.eq.s32.totalorder %s19, 3
      %p79 = por %p77, %p78
      %p80 = scmp.ne.s32.totalorder %s71, %s72
      %p81 = scmp.eq.s32.totalorder %s19, 0
      %p82 = por %p80, %p81
      %p83 = scmp.ne.s32.totalorder %s71, %s72
      %p84 = scmp.eq.s32.totalorder %s20, 3
      %p85 = por %p83, %p84
      %p87 = scmp.ne.s32.totalorder %s72, %s86
      %p88 = scmp.eq.s32.totalorder %s20, 0
      %p89 = por %p87, %p88
      %s91 = sadd.s32 %s90, 1
      %p94 = scmp.eq.s32.totalorder %s14, 3
      %p95 = scmp.ne.s32.totalorder %s90, %s92
      %p96 = scmp.eq.s32.totalorder %s14, 0
      %p97 = por %p95, %p96
      %p98 = scmp.ne.s32.totalorder %s90, %s92
      %p99 = scmp.eq.s32.totalorder %s19, 3
      %p100 = por %p98, %p99
      %p101 = scmp.ne.s32.totalorder %s92, %s93
      %p102 = scmp.eq.s32.totalorder %s19, 0
      %p103 = por %p101, %p102
      %p104 = scmp.ne.s32.totalorder %s92, %s93
      %p105 = scmp.eq.s32.totalorder %s20, 3
      %p106 = por %p104, %p105
      %p108 = scmp.ne.s32.totalorder %s93, %s107
      %p109 = scmp.eq.s32.totalorder %s20, 0
      %p110 = por %p108, %p109
      %s112 = sadd.s32 %s111, 1
      %p115 = scmp.eq.s32.totalorder %s14, 3
      %p116 = scmp.ne.s32.totalorder %s111, %s113
      %p117 = scmp.eq.s32.totalorder %s14, 0
      %p118 = por %p116, %p117
      %p119 = scmp.ne.s32.totalorder %s111, %s113
      %p120 = scmp.eq.s32.totalorder %s19, 3
      %p121 = por %p119, %p120
      %p122 = scmp.ne.s32.totalorder %s113, %s114
      %p123 = scmp.eq.s32.totalorder %s19, 0
      %p124 = por %p122, %p123
      %p125 = scmp.ne.s32.totalorder %s113, %s114
      %p126 = scmp.eq.s32.totalorder %s20, 3
      %p127 = por %p125, %p126
      %p129 = scmp.ne.s32.totalorder %s114, %s128
      %p130 = scmp.eq.s32.totalorder %s20, 0
      %p131 = por %p129, %p130
      %s132 = ssub.s32 %s14, %s21
      %p133 = scmp.eq.s32.totalorder %s132, 0
      %s135 = sadd.s32 %s134, 1
      %s136 = scalar_select %p133, %s134, %s135
      %p139 = pneg %p133
      %p140 = scmp.eq.s32.totalorder %s14, 3
      %p141 = por %p139, %p140
      %p142 = scmp.ne.s32.totalorder %s134, %s137
      %p143 = scmp.eq.s32.totalorder %s14, 0
      %p144 = por %p142, %p143
      %p145 = scmp.ne.s32.totalorder %s134, %s137
      %p146 = scmp.eq.s32.totalorder %s19, 3
      %p147 = por %p145, %p146
      %p148 = scmp.ne.s32.totalorder %s137, %s138
      %p149 = scmp.eq.s32.totalorder %s19, 0
      %p150 = por %p148, %p149
      %p151 = scmp.ne.s32.totalorder %s137, %s138
      %p152 = scmp.eq.s32.totalorder %s20, 3
      %p153 = por %p151, %p152
      %p155 = scmp.ne.s32.totalorder %s138, %s154
      %p156 = scmp.eq.s32.totalorder %s20, 0
      %p157 = por %p155, %p156
      %p158 = scmp.le.s32.totalorder 1, %s14
      %p159 = scmp.lt.s32.totalorder %s14, 5
      %p160 = pnand %p158, %p159
      %p161 = pneg %p160
      // Predicated region
      $region9: #{tpu_custom_call.1} parent=5 // pred_check
        _
      $region10: #{tpu_custom_call.1} parent=5 // pred_check_branch
        %163 = sbr.rel (%p160) target = $region12
      $region11: #{tpu_custom_call.1} parent=5 // pred_region
        %s164 = ssub.s32 %s14, 1
        // Predicated region
        $region13: #{tpu_custom_call.1} parent=11 // pred_check
          %p165 = pneg %p61
        $region14: #{tpu_custom_call.1} parent=11 // pred_check_branch
          %167 = sbr.rel (%p165) target = $region16
        $region15: #{tpu_custom_call.1} parent=11 // pred_region
          _
        $region16: #{tpu_custom_call.1} parent=11 // pred_fallthru
          _
        // Predicated region
        $region17: #{tpu_custom_call.1} parent=11 // pred_check
          %p168 = pneg %p82
        $region18: #{tpu_custom_call.1} parent=11 // pred_check_branch
          %170 = sbr.rel (%p168) target = $region20
        $region19: #{tpu_custom_call.1} parent=11 // pred_region
          _
        $region20: #{tpu_custom_call.1} parent=11 // pred_fallthru
          _
        // Predicated region
        $region21: #{tpu_custom_call.1} parent=11 // pred_check
          %p171 = pneg %p103
        $region22: #{tpu_custom_call.1} parent=11 // pred_check_branch
          %173 = sbr.rel (%p171) target = $region24
        $region23: #{tpu_custom_call.1} parent=11 // pred_region
          _
        $region24: #{tpu_custom_call.1} parent=11 // pred_fallthru
          _
        // Predicated region
        $region25: #{tpu_custom_call.1} parent=11 // pred_check
          %p174 = pneg %p124
        $region26: #{tpu_custom_call.1} parent=11 // pred_check_branch
          %176 = sbr.rel (%p174) target = $region28
        $region27: #{tpu_custom_call.1} parent=11 // pred_region
          _
        $region28: #{tpu_custom_call.1} parent=11 // pred_fallthru
          _
      $region12: #{tpu_custom_call.1} parent=5 // pred_fallthru
        _
      %p177 = scmp.lt.s32.totalorder %s14, 4
      // Predicated region
      $region29: #{tpu_custom_call.1} parent=5 // pred_check
        %p178 = pneg %p177
      $region30: #{tpu_custom_call.1} parent=5 // pred_check_branch
        %180 = sbr.rel (%p178) target = $region32
      $region31: #{tpu_custom_call.1} parent=5 // pred_region
        // Predicated region
        $region33: #{tpu_custom_call.1} parent=31 // pred_check
          %p181 = pneg %p34
        $region34: #{tpu_custom_call.1} parent=31 // pred_check_branch
          %183 = sbr.rel (%p181) target = $region36
        $region35: #{tpu_custom_call.1} parent=31 // pred_region
          %s184 = smul.u32 16, %s14
          %p185 = scmp.lt.s32.totalorder %s184, 63
          %s186 = scalar_select %p185, %s184, 63
          %s187 = smul.addr %s186, 8
          %s188 = scalar_lea.vmem %s0, %s187
          %s189 = smul.u32 16, %s14
        $region36: #{tpu_custom_call.1} parent=31 // pred_fallthru
          _
      $region32: #{tpu_custom_call.1} parent=5 // pred_fallthru
        _
      %p190 = scmp.le.s32.totalorder 1, %s14
      %p191 = scmp.lt.s32.totalorder %s14, 5
      %p192 = pnand %p190, %p191
      %p193 = pneg %p192
      // Predicated region
      $region37: #{tpu_custom_call.1} parent=5 // pred_check
        _
      $region38: #{tpu_custom_call.1} parent=5 // pred_check_branch
        %195 = sbr.rel (%p192) target = $region40
      $region39: #{tpu_custom_call.1} parent=5 // pred_region
        %s196 = ssub.s32 %s14, 1
        %s197 = smul.u32 16, %s19
        %p198 = scmp.lt.s32.totalorder %s197, 63
        %s199 = scalar_select %p198, %s197, 63
        %s200 = smul.addr %s199, 8
        %s201 = scalar_lea.vmem %s0, %s200
        %p202 = pneg %p40
        %p203 = pneg %p37
        %p204 = pneg %p61
        %p205 = pneg %p58
        %p206 = pneg %p82
        %p207 = pneg %p79
        %p208 = pneg %p103
        %p209 = pneg %p100
        %p210 = pneg %p124
        %p211 = pneg %p121
        %p212 = pneg %p150
        %p213 = pneg %p147
        %s214 = sand.u32 %s137, 1
        %s215 = scalar_lea.sflag [#allocation3], %s214
        %s216 = sand.u32 %s137, 1
        %s217 = smul.addr %s216, 128
        %s218 = scalar_lea.vmem [#allocation2], %s217
        %s219 = smul.u32 16, %s19
        %p220 = scmp.lt.s32.totalorder %s219, 63
        %s221 = scalar_select %p220, %s219, 63
        %s222 = smul.addr %s221, 8
        %s223 = scalar_lea.vmem %s0, %s222
        %s224 = smul.u32 16, %s19
        %s225 = smul.u32 16, %s19
        %v227 = vld [vmem:[%s223] sm:$0xff]
        %v228 = vld [vmem:[%s223 + $0x8] sm:$0xff]
        %v229 = vld [vmem:[%s223 + $0x10] sm:$0xff]
        %v230 = vld [vmem:[%s223 + $0x18] sm:$0xff]
        %v231 = vld [vmem:[%s223 + $0x20] sm:$0xff]
        %v232 = vld [vmem:[%s223 + $0x28] sm:$0xff]
        %v233 = vld [vmem:[%s223 + $0x30] sm:$0xff]
        %v234 = vld [vmem:[%s223 + $0x38] sm:$0xff]
        %v235 = vld [vmem:[%s223 + $0x40] sm:$0xff]
        %v236 = vld [vmem:[%s223 + $0x48] sm:$0xff]
        %v237 = vld [vmem:[%s223 + $0x50] sm:$0xff]
        %v238 = vld [vmem:[%s223 + $0x58] sm:$0xff]
        %v239 = vld [vmem:[%s223 + $0x60] sm:$0xff]
        %v240 = vld [vmem:[%s223 + $0x68] sm:$0xff]
        %v241 = vld [vmem:[%s223 + $0x70] sm:$0xff]
        %v242 = vld [vmem:[%s223 + $0x78] sm:$0xff]
        %v243 = vpack.c.bf16 %v228, %v227
        %v244 = vpack.c.bf16 %v230, %v229
        %v245 = vpack.c.bf16 %v232, %v231
        %v246 = vpack.c.bf16 %v234, %v233
        %v247 = vpack.c.bf16 %v236, %v235
        %v248 = vpack.c.bf16 %v238, %v237
        %v249 = vpack.c.bf16 %v240, %v239
        %v250 = vpack.c.bf16 %v242, %v241
        %v251 = vld [vmem:[%s1] sm:$0xf]
        %v252 = vld [vmem:[%s1 + $0x4] sm:$0xf]
        %v253 = vld [vmem:[%s2] sm:$0x1]
        %v255 = vlaneseq
        %v256 = vshrl.u32 %v255, 7
        %v257 = vsub.s32 0, %v256
        %v258 = vrot.slane %v253, %v257
        %v262 = vunpack.c.l.b16 %v251
        %v263 = vunpack.c.l.b16 %v252
        %v264 = vpack.c.b16 %v263, %v262
        %vm266 = vcmask 130048
        %v268 = vsel %vm266, %v243, 0
        %v271 = vsel %vm266, %v244, 0
        %v274 = vsel %vm266, %v245, 0
        %v277 = vsel %vm266, %v246, 0
        %v280 = vsel %vm266, %v247, 0
        %v283 = vsel %vm266, %v248, 0
        %v286 = vsel %vm266, %v249, 0
        %v289 = vsel %vm266, %v250, 0
        %291 = vmatprep.subr.bf16.mxu0 0
        %292 = vmatpush1.bf16.msra.mxu0 0
        %293 = vmatprep.subr.bf16.mxu0 0
        %294 = vmatpush1.bf16.msra.mxu0 0
        %295 = vmatprep.subr.bf16.mxu0 0
        %296 = vmatpush1.bf16.msra.mxu0 0
        %297 = vmatprep.subr.bf16.mxu0 0
        %298 = vmatpush1.bf16.msra.mxu0 0
        %299 = vmatprep.subr.bf16.mxu0 0
        %300 = vmatpush1.bf16.msra.mxu0 0
        %301 = vmatprep.subr.bf16.mxu0 0
        %302 = vmatpush1.bf16.msra.mxu0 0
        %303 = vmatprep.subr.bf16.mxu0 0
        %304 = vmatpush1.bf16.msra.mxu0 0
        %305 = vmatprep.subr.bf16.mxu0 0
        %306 = vmatpush1.bf16.msra.mxu0 %v264
        %307 = vmatprep.subr.bf16.mxu0 0
        %308 = vmatpush2.bf16.msra.mxu0 0
        %309 = vmatprep.subr.bf16.mxu0 0
        %310 = vmatpush2.bf16.msra.mxu0 0
        %311 = vmatprep.subr.bf16.mxu0 0
        %312 = vmatpush2.bf16.msra.mxu0 0
        %313 = vmatprep.subr.bf16.mxu0 0
        %314 = vmatpush2.bf16.msra.mxu0 0
        %315 = vmatprep.subr.bf16.mxu0 0
        %316 = vmatpush2.bf16.msra.mxu0 0
        %317 = vmatprep.subr.bf16.mxu0 0
        %318 = vmatpush2.bf16.msra.mxu0 0
        %319 = vmatprep.subr.bf16.mxu0 0
        %320 = vmatpush2.bf16.msra.mxu0 0
        %321 = vmatprep.subr.bf16.mxu0 0
        %322 = vmatpush2.bf16.msra.mxu0 0
        %323 = vmatprep.mubr.bf16.mxu0 0
        %324 = vmatmul.mubr.bf16.gmra.mxu0 %v268
        %v325 = vpop.f32.mrf.mxu0
        %v326 = vadd.f32 %v258, %v325
        %v327 = vpop.f32.mrf.mxu0
        %v328 = vpop.f32.mrf.mxu0
        %v329 = vadd.f32 %v258, %v328
        %v330 = vpop.f32.mrf.mxu0
        %331 = vmatprep.mubr.bf16.mxu0 0
        %332 = vmatmul.mubr.bf16.gmra.mxu0 %v271
        %v333 = vpop.f32.mrf.mxu0
        %v334 = vadd.f32 %v258, %v333
        %v335 = vpop.f32.mrf.mxu0
        %v336 = vpop.f32.mrf.mxu0
        %v337 = vadd.f32 %v258, %v336
        %v338 = vpop.f32.mrf.mxu0
        %339 = vmatprep.mubr.bf16.mxu0 0
        %340 = vmatmul.mubr.bf16.gmra.mxu0 %v274
        %v341 = vpop.f32.mrf.mxu0
        %v342 = vadd.f32 %v258, %v341
        %v343 = vpop.f32.mrf.mxu0
        %v344 = vpop.f32.mrf.mxu0
        %v345 = vadd.f32 %v258, %v344
        %v346 = vpop.f32.mrf.mxu0
        %347 = vmatprep.mubr.bf16.mxu0 0
        %348 = vmatmul.mubr.bf16.gmra.mxu0 %v277
        %v349 = vpop.f32.mrf.mxu0
        %v350 = vadd.f32 %v258, %v349
        %v351 = vpop.f32.mrf.mxu0
        %v352 = vpop.f32.mrf.mxu0
        %v353 = vadd.f32 %v258, %v352
        %v354 = vpop.f32.mrf.mxu0
        %355 = vmatprep.mubr.bf16.mxu0 0
        %356 = vmatmul.mubr.bf16.gmra.mxu0 %v280
        %v357 = vpop.f32.mrf.mxu0
        %v358 = vadd.f32 %v258, %v357
        %v359 = vpop.f32.mrf.mxu0
        %v360 = vpop.f32.mrf.mxu0
        %v361 = vadd.f32 %v258, %v360
        %v362 = vpop.f32.mrf.mxu0
        %363 = vmatprep.mubr.bf16.mxu0 0
        %364 = vmatmul.mubr.bf16.gmra.mxu0 %v283
        %v365 = vpop.f32.mrf.mxu0
        %v366 = vadd.f32 %v258, %v365
        %v367 = vpop.f32.mrf.mxu0
        %v368 = vpop.f32.mrf.mxu0
        %v369 = vadd.f32 %v258, %v368
        %v370 = vpop.f32.mrf.mxu0
        %371 = vmatprep.mubr.bf16.mxu0 0
        %372 = vmatmul.mubr.bf16.gmra.mxu0 %v286
        %v373 = vpop.f32.mrf.mxu0
        %v374 = vadd.f32 %v258, %v373
        %v375 = vpop.f32.mrf.mxu0
        %v376 = vpop.f32.mrf.mxu0
        %v377 = vadd.f32 %v258, %v376
        %v378 = vpop.f32.mrf.mxu0
        %379 = vmatprep.mubr.bf16.mxu0 0
        %380 = vmatmul.mubr.bf16.gmra.mxu0 %v289
        %v381 = vpop.f32.mrf.mxu0
        %v382 = vadd.f32 %v258, %v381
        %v383 = vpop.f32.mrf.mxu0
        %v384 = vpop.f32.mrf.mxu0
        %v385 = vadd.f32 %v258, %v384
        %v386 = vpop.f32.mrf.mxu0
        %387 = vdwg.mxu0
        %v388 = vmax.f32 %v326, 0.0
        %v389 = vmax.f32 %v329, 0.0
        %v390 = vmax.f32 %v334, 0.0
        %v391 = vmax.f32 %v337, 0.0
        %v392 = vmax.f32 %v342, 0.0
        %v393 = vmax.f32 %v345, 0.0
        %v394 = vmax.f32 %v350, 0.0
        %v395 = vmax.f32 %v353, 0.0
        %v396 = vmax.f32 %v358, 0.0
        %v397 = vmax.f32 %v361, 0.0
        %v398 = vmax.f32 %v366, 0.0
        %v399 = vmax.f32 %v369, 0.0
        %v400 = vmax.f32 %v374, 0.0
        %v401 = vmax.f32 %v377, 0.0
        %v402 = vmax.f32 %v382, 0.0
        %v403 = vmax.f32 %v385, 0.0
        %v404 = vpack.c.bf16 %v389, %v388
        %v405 = vpack.c.bf16 %v391, %v390
        %v406 = vpack.c.bf16 %v393, %v392
        %v407 = vpack.c.bf16 %v395, %v394
        %v408 = vpack.c.bf16 %v397, %v396
        %v409 = vpack.c.bf16 %v399, %v398
        %v410 = vpack.c.bf16 %v401, %v400
        %v411 = vpack.c.bf16 %v403, %v402
        %v412 = vld [vmem:[%s3] sm:$0xf]
        %v413 = vld [vmem:[%s3 + $0x4] sm:$0xf]
        %v414 = vld [vmem:[%s3 + $0x8] sm:$0xf]
        %v415 = vld [vmem:[%s3 + $0xc] sm:$0xf]
        %v416 = vld [vmem:[%s3 + $0x10] sm:$0xf]
        %v417 = vld [vmem:[%s3 + $0x14] sm:$0xf]
        %v418 = vld [vmem:[%s3 + $0x18] sm:$0xf]
        %v419 = vld [vmem:[%s3 + $0x1c] sm:$0xf]
        %v420 = vld [vmem:[%s3 + $0x20] sm:$0xf]
        %v421 = vld [vmem:[%s3 + $0x24] sm:$0xf]
        %v422 = vld [vmem:[%s3 + $0x28] sm:$0xf]
        %v423 = vld [vmem:[%s3 + $0x2c] sm:$0xf]
        %v424 = vld [vmem:[%s3 + $0x30] sm:$0xf]
        %v425 = vld [vmem:[%s3 + $0x34] sm:$0xf]
        %v426 = vld [vmem:[%s3 + $0x38] sm:$0xf]
        %v427 = vld [vmem:[%s3 + $0x3c] sm:$0xf]
        %v428 = vld [vmem:[%s4] sm:$0x1]
        %v430 = vlaneseq
        %v431 = vshrl.u32 %v430, 7
        %v432 = vsub.s32 0, %v431
        %v433 = vrot.slane %v428, %v432
        %v451 = vunpack.c.l.b16 %v412
        %v452 = vunpack.c.l.b16 %v413
        %v453 = vunpack.c.l.b16 %v414
        %v454 = vunpack.c.l.b16 %v415
        %v455 = vunpack.c.l.b16 %v416
        %v456 = vunpack.c.l.b16 %v417
        %v457 = vunpack.c.l.b16 %v418
        %v458 = vunpack.c.l.b16 %v419
        %v459 = vunpack.c.l.b16 %v420
        %v460 = vunpack.c.l.b16 %v421
        %v461 = vunpack.c.l.b16 %v422
        %v462 = vunpack.c.l.b16 %v423
        %v463 = vunpack.c.l.b16 %v424
        %v464 = vunpack.c.l.b16 %v425
        %v465 = vunpack.c.l.b16 %v426
        %v466 = vunpack.c.l.b16 %v427
        %v467 = vpack.c.b16 %v452, %v451
        %v468 = vpack.c.b16 %v454, %v453
        %v469 = vpack.c.b16 %v456, %v455
        %v470 = vpack.c.b16 %v458, %v457
        %v471 = vpack.c.b16 %v460, %v459
        %v472 = vpack.c.b16 %v462, %v461
        %v473 = vpack.c.b16 %v464, %v463
        %v474 = vpack.c.b16 %v466, %v465
        %483 = vmatprep.subr.bf16.mxu0 0
        %484 = vmatpush1.bf16.msra.mxu0 %v474
        %485 = vmatprep.subr.bf16.mxu0 0
        %486 = vmatpush1.bf16.msra.mxu0 %v473
        %487 = vmatprep.subr.bf16.mxu0 0
        %488 = vmatpush1.bf16.msra.mxu0 %v472
        %489 = vmatprep.subr.bf16.mxu0 0
        %490 = vmatpush1.bf16.msra.mxu0 %v471
        %491 = vmatprep.subr.bf16.mxu0 0
        %492 = vmatpush1.bf16.msra.mxu0 %v470
        %493 = vmatprep.subr.bf16.mxu0 0
        %494 = vmatpush1.bf16.msra.mxu0 %v469
        %495 = vmatprep.subr.bf16.mxu0 0
        %496 = vmatpush1.bf16.msra.mxu0 %v468
        %497 = vmatprep.subr.bf16.mxu0 0
        %498 = vmatpush1.bf16.msra.mxu0 %v467
        %499 = vmatprep.subr.bf16.mxu0 0
        %500 = vmatpush2.bf16.msra.mxu0 0
        %501 = vmatprep.subr.bf16.mxu0 0
        %502 = vmatpush2.bf16.msra.mxu0 0
        %503 = vmatprep.subr.bf16.mxu0 0
        %504 = vmatpush2.bf16.msra.mxu0 0
        %505 = vmatprep.subr.bf16.mxu0 0
        %506 = vmatpush2.bf16.msra.mxu0 0
        %507 = vmatprep.subr.bf16.mxu0 0
        %508 = vmatpush2.bf16.msra.mxu0 0
        %509 = vmatprep.subr.bf16.mxu0 0
        %510 = vmatpush2.bf16.msra.mxu0 0
        %511 = vmatprep.subr.bf16.mxu0 0
        %512 = vmatpush2.bf16.msra.mxu0 0
        %513 = vmatprep.subr.bf16.mxu0 0
        %514 = vmatpush2.bf16.msra.mxu0 0
        %515 = vmatprep.mubr.bf16.mxu0 0
        %516 = vmatmul.mubr.bf16.gmra.mxu0 %v404
        %v517 = vpop.f32.mrf.mxu0
        %v518 = vadd.f32 %v433, %v517
        %v519 = vpop.f32.mrf.mxu0
        %v520 = vpop.f32.mrf.mxu0
        %v521 = vadd.f32 %v433, %v520
        %v522 = vpop.f32.mrf.mxu0
        %523 = vmatprep.mubr.bf16.mxu0 0
        %524 = vmatmul.mubr.bf16.gmra.mxu0 %v405
        %v525 = vpop.f32.mrf.mxu0
        %v526 = vadd.f32 %v433, %v525
        %v527 = vpop.f32.mrf.mxu0
        %v528 = vpop.f32.mrf.mxu0
        %v529 = vadd.f32 %v433, %v528
        %v530 = vpop.f32.mrf.mxu0
        %531 = vmatprep.mubr.bf16.mxu0 0
        %532 = vmatmul.mubr.bf16.gmra.mxu0 %v406
        %v533 = vpop.f32.mrf.mxu0
        %v534 = vadd.f32 %v433, %v533
        %v535 = vpop.f32.mrf.mxu0
        %v536 = vpop.f32.mrf.mxu0
        %v537 = vadd.f32 %v433, %v536
        %v538 = vpop.f32.mrf.mxu0
        %539 = vmatprep.mubr.bf16.mxu0 0
        %540 = vmatmul.mubr.bf16.gmra.mxu0 %v407
        %v541 = vpop.f32.mrf.mxu0
        %v542 = vadd.f32 %v433, %v541
        %v543 = vpop.f32.mrf.mxu0
        %v544 = vpop.f32.mrf.mxu0
        %v545 = vadd.f32 %v433, %v544
        %v546 = vpop.f32.mrf.mxu0
        %547 = vmatprep.mubr.bf16.mxu0 0
        %548 = vmatmul.mubr.bf16.gmra.mxu0 %v408
        %v549 = vpop.f32.mrf.mxu0
        %v550 = vadd.f32 %v433, %v549
        %v551 = vpop.f32.mrf.mxu0
        %v552 = vpop.f32.mrf.mxu0
        %v553 = vadd.f32 %v433, %v552
        %v554 = vpop.f32.mrf.mxu0
        %555 = vmatprep.mubr.bf16.mxu0 0
        %556 = vmatmul.mubr.bf16.gmra.mxu0 %v409
        %v557 = vpop.f32.mrf.mxu0
        %v558 = vadd.f32 %v433, %v557
        %v559 = vpop.f32.mrf.mxu0
        %v560 = vpop.f32.mrf.mxu0
        %v561 = vadd.f32 %v433, %v560
        %v562 = vpop.f32.mrf.mxu0
        %563 = vmatprep.mubr.bf16.mxu0 0
        %564 = vmatmul.mubr.bf16.gmra.mxu0 %v410
        %v565 = vpop.f32.mrf.mxu0
        %v566 = vadd.f32 %v433, %v565
        %v567 = vpop.f32.mrf.mxu0
        %v568 = vpop.f32.mrf.mxu0
        %v569 = vadd.f32 %v433, %v568
        %v570 = vpop.f32.mrf.mxu0
        %571 = vmatprep.mubr.bf16.mxu0 0
        %572 = vmatmul.mubr.bf16.gmra.mxu0 %v411
        %v573 = vpop.f32.mrf.mxu0
        %v574 = vadd.f32 %v433, %v573
        %v575 = vpop.f32.mrf.mxu0
        %v576 = vpop.f32.mrf.mxu0
        %v577 = vadd.f32 %v433, %v576
        %v578 = vpop.f32.mrf.mxu0
        %579 = vdwg.mxu0
        %v580 = vmax.f32 %v518, 0.0
        %v581 = vmax.f32 %v521, 0.0
        %v582 = vmax.f32 %v526, 0.0
        %v583 = vmax.f32 %v529, 0.0
        %v584 = vmax.f32 %v534, 0.0
        %v585 = vmax.f32 %v537, 0.0
        %v586 = vmax.f32 %v542, 0.0
        %v587 = vmax.f32 %v545, 0.0
        %v588 = vmax.f32 %v550, 0.0
        %v589 = vmax.f32 %v553, 0.0
        %v590 = vmax.f32 %v558, 0.0
        %v591 = vmax.f32 %v561, 0.0
        %v592 = vmax.f32 %v566, 0.0
        %v593 = vmax.f32 %v569, 0.0
        %v594 = vmax.f32 %v574, 0.0
        %v595 = vmax.f32 %v577, 0.0
        %596 = vst [vmem:[%s218] sm:$0xff] %v580
        %597 = vst [vmem:[%s218 + $0x8] sm:$0xff] %v581
        %598 = vst [vmem:[%s218 + $0x10] sm:$0xff] %v582
        %599 = vst [vmem:[%s218 + $0x18] sm:$0xff] %v583
        %600 = vst [vmem:[%s218 + $0x20] sm:$0xff] %v584
        %601 = vst [vmem:[%s218 + $0x28] sm:$0xff] %v585
        %602 = vst [vmem:[%s218 + $0x30] sm:$0xff] %v586
        %603 = vst [vmem:[%s218 + $0x38] sm:$0xff] %v587
        %604 = vst [vmem:[%s218 + $0x40] sm:$0xff] %v588
        %605 = vst [vmem:[%s218 + $0x48] sm:$0xff] %v589
        %606 = vst [vmem:[%s218 + $0x50] sm:$0xff] %v590
        %607 = vst [vmem:[%s218 + $0x58] sm:$0xff] %v591
        %608 = vst [vmem:[%s218 + $0x60] sm:$0xff] %v592
        %609 = vst [vmem:[%s218 + $0x68] sm:$0xff] %v593
        %610 = vst [vmem:[%s218 + $0x70] sm:$0xff] %v594
        %611 = vst [vmem:[%s218 + $0x78] sm:$0xff] %v595
        %s612 = sand.u32 %s137, 1
        %s613 = scalar_lea.sflag [#allocation3], %s612
        %s614 = sand.u32 %s137, 1
        %s615 = smul.addr %s614, 128
        %s616 = scalar_lea.vmem [#allocation2], %s615
        // Predicated region
        $region41: #{tpu_custom_call.1} parent=39 // pred_check
          %p617 = pneg %p147
        $region42: #{tpu_custom_call.1} parent=39 // pred_check_branch
          %619 = sbr.rel (%p617) target = $region44
        $region43: #{tpu_custom_call.1} parent=39 // pred_region
          %s620 = smul.u32 16, %s19
          %s622 = ssub.s32 2048, 2048
          %623 = vsyncadd %s613, %s622
          %s624 = smul.addr %s620, 128
          %s625 = scalar_lea.hbm %s5, %s624
          %s626 = sshll.u32 %s616, 4
          %s627 = int_to_ptr.vmem [resolvable:$true] %s626
          %632 = dma.vmem_to_hbm [thread:$0]  %s627, 2048, %s625, %s613, 128, 128, 8
        $region44: #{tpu_custom_call.1} parent=39 // pred_fallthru
          _
      $region40: #{tpu_custom_call.1} parent=5 // pred_fallthru
        _
      %p633 = scmp.le.s32.totalorder 2, %s14
      // Predicated region
      $region45: #{tpu_custom_call.1} parent=5 // pred_check
        %p634 = pneg %p633
      $region46: #{tpu_custom_call.1} parent=5 // pred_check_branch
        %636 = sbr.rel (%p634) target = $region48
      $region47: #{tpu_custom_call.1} parent=5 // pred_region
        %s637 = ssub.s32 %s14, 2
        // Predicated region
        $region49: #{tpu_custom_call.1} parent=47 // pred_check
          %p638 = pneg %p153
        $region50: #{tpu_custom_call.1} parent=47 // pred_check_branch
          %640 = sbr.rel (%p638) target = $region52
        $region51: #{tpu_custom_call.1} parent=47 // pred_region
          %s641 = sand.u32 %s138, 1
          %s642 = scalar_lea.sflag [#allocation3], %s641
          %s643 = sand.u32 %s138, 1
          %s644 = smul.addr %s643, 128
          %s645 = scalar_lea.vmem [#allocation2], %s644
          %646 = dma.done %s642, 2048
        $region52: #{tpu_custom_call.1} parent=47 // pred_fallthru
          _
      $region48: #{tpu_custom_call.1} parent=5 // pred_fallthru
        _
    $region6: #{tpu_custom_call.1} parent=1 // loop_footer
      %s18 = sadd.s32 1, %s14
    $region7: #{tpu_custom_call.1} parent=1 // loop_footer_branch
      %13 = sbr.rel target = $region3
    $region8: #{tpu_custom_call.1} parent=1 // loop_exit
      _
    %647 = vsyncpa [#allocation3], 1
    %s648 = scalar_lea.sflag [#allocation3], 1
    %649 = vsyncpa %s648, 1

</llo_original>
